<compile_context>
chip_gen: v5e
topology: v5e:2x2
jax: 0.10.0
libtpu: 0.0.40
codegen_flags: <defaults>
</compile_context>

<pallas_src>
import jax
import jax.numpy as jnp
from jax.experimental import pallas as pl
from jax.experimental.pallas import tpu as pltpu


def _cdiv(a, b):
    return -(-a // b)


def _tv_kernel(x_ref, oh_ref, ow_ref):
    """One grid step: accumulate squared H/W differences of a (TC, H, W) block.

    x_ref : (TC, H, W) input block in its native dtype.
    oh_ref: (1, H-1, W) f32 accumulator, VMEM-resident across the inner axis.
    ow_ref: (1, H, W-1) f32 accumulator, VMEM-resident across the inner axis.
    """
    step = pl.program_id(1)

    @pl.when(step == 0)
    def _init():
        oh_ref[...] = jnp.zeros_like(oh_ref)
        ow_ref[...] = jnp.zeros_like(ow_ref)

    x = x_ref[...].astype(jnp.float32)            # (TC, H, W)

    # Neighbouring-pixel differences (static 1-off slices).
    dh = x[:, 1:, :] - x[:, :-1, :]               # (TC, H-1, W)
    dw = x[:, :, 1:] - x[:, :, :-1]               # (TC, H, W-1)

    # Partial reduction over the slice axis only (VPU vreg adds, no cross-lane
    # XLU reduce, no SMEM round-trip). The final cross-lane sum is deferred to
    # the wrapper, which runs it once over a tiny (2, H, W)-ish array.
    oh_ref[0] += jnp.sum(dh * dh, axis=0)
    ow_ref[0] += jnp.sum(dw * dw, axis=0)


def _tv_loss_ref(x, weight=1.0):
    """Pure-JAX reference mirroring the PyTorch forward."""
    n, c, h, w = x.shape
    count_h = c * (h - 1) * w
    count_w = c * h * (w - 1)
    h_tv = jnp.sum((x[:, :, 1:, :] - x[:, :, : h - 1, :]) ** 2)
    w_tv = jnp.sum((x[:, :, :, 1:] - x[:, :, :, : w - 1]) ** 2)
    return weight * 2.0 * (h_tv / count_h + w_tv / count_w) / n


def tv_loss(
    x,
    weight=1.0,
    *,
    target_block_bytes=2 * 1024 * 1024,   # per input buffer (double-buffered)
    num_core_splits=2,                    # parallel grid axis (v7x megacore)
    vmem_limit_bytes=32 * 1024 * 1024,    # raise v5e's 16 MiB default
):
    """Pallas TPU equivalent of TVLoss.forward(x). x is NCHW."""
    n, c, h, w = x.shape

    if h < 2 or w < 2:
        # Degenerate spatial dims: reproduce the PyTorch behaviour (division by
        # a zero count) without building zero-sized Pallas blocks.
        return _tv_loss_ref(x, weight).astype(jnp.float32)

    nc = n * c
    x_flat = x.reshape(nc, h, w)

    # TODO(synk): for very large images where a single (1, H, W) slice
    # approaches the VMEM budget (e.g. 4K f32), add H-tiling with a 1-row halo.
    slice_bytes = h * w * x.dtype.itemsize
    tc_cap = max(1, target_block_bytes // slice_bytes)   # slices per block
    per_core = _cdiv(nc, num_core_splits)
    tc = int(min(tc_cap, per_core))
    steps = _cdiv(per_core, tc)
    padded = num_core_splits * steps * tc
    if padded != nc:
        # Zero slices contribute exactly zero to both TV terms, so padding the
        # leading axis is safe.
        pad = jnp.zeros((padded - nc, h, w), dtype=x.dtype)
        x_flat = jnp.concatenate([x_flat, pad], axis=0)

    cost = pl.CostEstimate(
        flops=8 * nc * h * w,
        transcendentals=0,
        bytes_accessed=padded * h * w * x.dtype.itemsize,
    )

    out_h, out_w = pl.pallas_call(
        _tv_kernel,
        out_shape=(
            jax.ShapeDtypeStruct((num_core_splits, h - 1, w), jnp.float32),
            jax.ShapeDtypeStruct((num_core_splits, h, w - 1), jnp.float32),
        ),
        grid_spec=pltpu.PrefetchScalarGridSpec(
            num_scalar_prefetch=0,
            grid=(num_core_splits, steps),
            in_specs=[
                pl.BlockSpec((tc, h, w), lambda p, i: (p * steps + i, 0, 0)),
            ],
            out_specs=[
                pl.BlockSpec((1, h - 1, w), lambda p, i: (p, 0, 0)),
                pl.BlockSpec((1, h, w - 1), lambda p, i: (p, 0, 0)),
            ],
        ),
        compiler_params=pltpu.CompilerParams(
            dimension_semantics=("parallel", "arbitrary"),
            vmem_limit_bytes=vmem_limit_bytes,
        ),
        cost_estimate=cost,
    )(x_flat)

    h_tv = jnp.sum(out_h)
    w_tv = jnp.sum(out_w)

    # Faithful to the PyTorch quirk: counts exclude the batch dim, final /n.
    count_h = c * (h - 1) * w   # _tensor_size(x[:, :, 1:, :])
    count_w = c * h * (w - 1)   # _tensor_size(x[:, :, :, 1:])

    return (weight * 2.0 * (h_tv / count_h + w_tv / count_w) / n).astype(jnp.float32)


if __name__ == "__main__":
    key = jax.random.PRNGKey(0)
    # Small NCHW input consistent with the module's assumptions.
    x = jax.random.normal(key, (2, 4, 16, 16), dtype=jnp.float32)

    out = tv_loss(x, weight=1.0)
    out = jax.block_until_ready(out)

    ref = _tv_loss_ref(x, weight=1.0)
    assert jnp.allclose(out, ref, rtol=1e-5, atol=1e-5), (out, ref)

    print("KERNEL_OK")
</pallas_src>

<mosaic_0001>
module attributes {stable_mosaic.version = 11 : i64} {
  func.func @_tv_kernel(%arg0: i32, %arg1: i32, %arg2: memref<4x16x16xf32, #tpu.memory_space<vmem>>, %arg3: memref<1x15x16xf32, #tpu.memory_space<vmem>>, %arg4: memref<1x16x15xf32, #tpu.memory_space<vmem>>) attributes {dimension_semantics = [#tpu.dimension_semantics<parallel>, #tpu.dimension_semantics<arbitrary>], iteration_bounds = array<i64: 2, 1>, scalar_prefetch = 0 : i64, scratch_operands = 0 : i64, tpu.core_type = #tpu.core_type<tc>, window_params = [{transform_indices = @transform_0, window_bounds = array<i64: 4, 16, 16>}, {transform_indices = @transform_1, window_bounds = array<i64: 1, 15, 16>}, {transform_indices = @transform_2, window_bounds = array<i64: 1, 16, 15>}]} {
    %c0_i32 = arith.constant 0 : i32
    %0 = arith.cmpi eq, %arg1, %c0_i32 : i32
    %1 = arith.extui %0 : i1 to i32
    %c0_i32_0 = arith.constant 0 : i32
    %2 = arith.cmpi ne, %1, %c0_i32_0 : i32
    scf.if %2 {
      %cst_16 = arith.constant 0.000000e+00 : f32
      %26 = vector.broadcast %cst_16 : f32 to vector<1x15x16xf32>
      %c0_17 = arith.constant 0 : index
      %c0_18 = arith.constant 0 : index
      %c0_19 = arith.constant 0 : index
      %27 = vector.load %arg3[%c0_17, %c0_18, %c0_19] : memref<1x15x16xf32, #tpu.memory_space<vmem>>, vector<1x15x16xf32>
      tpu.vector_store %arg3[%c0_17, %c0_18, %c0_19], %26 {strides = array<i32>} : memref<1x15x16xf32, #tpu.memory_space<vmem>>, vector<1x15x16xf32>,
      %cst_20 = arith.constant 0.000000e+00 : f32
      %28 = vector.broadcast %cst_20 : f32 to vector<1x16x15xf32>
      %c0_21 = arith.constant 0 : index
      %c0_22 = arith.constant 0 : index
      %c0_23 = arith.constant 0 : index
      %29 = vector.load %arg4[%c0_21, %c0_22, %c0_23] : memref<1x16x15xf32, #tpu.memory_space<vmem>>, vector<1x16x15xf32>
      tpu.vector_store %arg4[%c0_21, %c0_22, %c0_23], %28 {strides = array<i32>} : memref<1x16x15xf32, #tpu.memory_space<vmem>>, vector<1x16x15xf32>,
    } else {
    }
    %c0 = arith.constant 0 : index
    %c0_1 = arith.constant 0 : index
    %c0_2 = arith.constant 0 : index
    %3 = vector.load %arg2[%c0, %c0_1, %c0_2] : memref<4x16x16xf32, #tpu.memory_space<vmem>>, vector<4x16x16xf32>
    %4 = vector.extract_strided_slice %3 {offsets = [0, 1, 0], sizes = [4, 15, 16], strides = [1, 1, 1]} : vector<4x16x16xf32> to vector<4x15x16xf32>
    %5 = vector.extract_strided_slice %3 {offsets = [0, 0, 0], sizes = [4, 15, 16], strides = [1, 1, 1]} : vector<4x16x16xf32> to vector<4x15x16xf32>
    %6 = arith.subf %4, %5 : vector<4x15x16xf32>
    %7 = vector.extract_strided_slice %3 {offsets = [0, 0, 1], sizes = [4, 16, 15], strides = [1, 1, 1]} : vector<4x16x16xf32> to vector<4x16x15xf32>
    %8 = vector.extract_strided_slice %3 {offsets = [0, 0, 0], sizes = [4, 16, 15], strides = [1, 1, 1]} : vector<4x16x16xf32> to vector<4x16x15xf32>
    %9 = arith.subf %7, %8 : vector<4x16x15xf32>
    %c0_3 = arith.constant 0 : index
    %c0_4 = arith.constant 0 : index
    %c0_5 = arith.constant 0 : index
    %10 = vector.load %arg3[%c0_3, %c0_4, %c0_5] : memref<1x15x16xf32, #tpu.memory_space<vmem>>, vector<1x15x16xf32>
    %11 = vector.shape_cast %10 : vector<1x15x16xf32> to vector<15x16xf32>
    %12 = arith.mulf %6, %6 : vector<4x15x16xf32>
    %cst = arith.constant dense<0.000000e+00> : vector<15x16xf32>
    %13 = vector.multi_reduction <add>, %12, %cst [0] : vector<4x15x16xf32> to vector<15x16xf32>
    %14 = arith.addf %11, %13 : vector<15x16xf32>
    %c0_6 = arith.constant 0 : index
    %c0_7 = arith.constant 0 : index
    %c0_8 = arith.constant 0 : index
    %15 = vector.load %arg3[%c0_6, %c0_7, %c0_8] : memref<1x15x16xf32, #tpu.memory_space<vmem>>, vector<1x15x16xf32>
    %16 = vector.shape_cast %15 : vector<1x15x16xf32> to vector<15x16xf32>
    %17 = vector.shape_cast %14 : vector<15x16xf32> to vector<1x15x16xf32>
    tpu.vector_store %arg3[%c0_6, %c0_7, %c0_8], %17 {strides = array<i32>} : memref<1x15x16xf32, #tpu.memory_space<vmem>>, vector<1x15x16xf32>,
    %c0_9 = arith.constant 0 : index
    %c0_10 = arith.constant 0 : index
    %c0_11 = arith.constant 0 : index
    %18 = vector.load %arg4[%c0_9, %c0_10, %c0_11] : memref<1x16x15xf32, #tpu.memory_space<vmem>>, vector<1x16x15xf32>
    %19 = vector.shape_cast %18 : vector<1x16x15xf32> to vector<16x15xf32>
    %20 = arith.mulf %9, %9 : vector<4x16x15xf32>
    %cst_12 = arith.constant dense<0.000000e+00> : vector<16x15xf32>
    %21 = vector.multi_reduction <add>, %20, %cst_12 [0] : vector<4x16x15xf32> to vector<16x15xf32>
    %22 = arith.addf %19, %21 : vector<16x15xf32>
    %c0_13 = arith.constant 0 : index
    %c0_14 = arith.constant 0 : index
    %c0_15 = arith.constant 0 : index
    %23 = vector.load %arg4[%c0_13, %c0_14, %c0_15] : memref<1x16x15xf32, #tpu.memory_space<vmem>>, vector<1x16x15xf32>
    %24 = vector.shape_cast %23 : vector<1x16x15xf32> to vector<16x15xf32>
    %25 = vector.shape_cast %22 : vector<16x15xf32> to vector<1x16x15xf32>
    tpu.vector_store %arg4[%c0_13, %c0_14, %c0_15], %25 {strides = array<i32>} : memref<1x16x15xf32, #tpu.memory_space<vmem>>, vector<1x16x15xf32>,
    return
  }
  func.func @transform_0(%arg0: i32, %arg1: i32) -> (i32, i32, i32) {
    %c1_i32 = arith.constant 1 : i32
    %0 = arith.muli %arg0, %c1_i32 : i32
    %1 = arith.addi %0, %arg1 : i32
    %c0_i32 = arith.constant 0 : i32
    %c0_i32_0 = arith.constant 0 : i32
    %c0_i32_1 = arith.constant 0 : i32
    return %1, %c0_i32, %c0_i32_0 : i32, i32, i32
  }
  func.func @transform_1(%arg0: i32, %arg1: i32) -> (i32, i32, i32) {
    %c0_i32 = arith.constant 0 : i32
    %c0_i32_0 = arith.constant 0 : i32
    %c0_i32_1 = arith.constant 0 : i32
    return %arg0, %c0_i32, %c0_i32_0 : i32, i32, i32
  }
  func.func @transform_2(%arg0: i32, %arg1: i32) -> (i32, i32, i32) {
    %c0_i32 = arith.constant 0 : i32
    %c0_i32_0 = arith.constant 0 : i32
    %c0_i32_1 = arith.constant 0 : i32
    return %arg0, %c0_i32, %c0_i32_0 : i32, i32, i32
  }
}

</mosaic_0001>

<llo_original>
// kernel: tpu_custom_call.1
$region0: #{tpu_custom_call.1}
  #allocation0 [shape = 'u32[]', space=smem, size = 0x4, offset = 0x4, fixed_abs, tag = 'smem constant byte address 0x4 - core index']
  #allocation1 [shape = 'u32[72,128]{1,0:T(1,128)}', space=vmem, size = 0x9000, scoped, tag = 'internal scratch']
  %s0 = inlined_call_operand.hbm [shape: f32[8,16,16], index: 0, kind: input, shape index: {}]
  %s1 = inlined_call_operand.vmem [shape: f32[2,15,16], index: 1, kind: output, shape index: {0}]
  %s2 = inlined_call_operand.vmem [shape: f32[2,16,15], index: 2, kind: output, shape index: {1}]
  %3 = xla_tuple %s1, %s2
  %s4 = sld [smem:[#allocation0]]
  $region53: #{tpu_custom_call.1} parent=0
    _
  %s6 = ssub.s32 1, %s4
  %s7 = scalar_select 0, %s6, %s4
  $region1: #{tpu_custom_call.1} parent=0
    #allocation2 [shape = 'u8[65536]{0}', space=vmem, size = 0x10000, scoped, tag = 'input window, operand 0']
    #allocation3 [shape = 's32[2]{0}', space=sflag, size = 0x8, scoped, tag = 'scoped memory for tpu_custom_call.1']
    %8 = vsyncpa [#allocation3], 0
    %s9 = scalar_lea.sflag [#allocation3], 1
    %10 = vsyncpa %s9, 0
    loop: start=0, step=1, limit=4
    $region2: #{tpu_custom_call.1} parent=1 // loop_pre_header
      _
    $region3: #{tpu_custom_call.1} parent=1 // loop_header
      %s12 = sphi 0, %s16
      %p13 = scmp.ge.s32.totalorder %s12, 4
      %s19 = sphi 0, %s31
      %s20 = sphi 0, %s27
      %s21 = sphi 0, %s19
      %s22 = sphi 0, %s20
      %s23 = sphi 0, %s21
      %s24 = sphi 0, %s22
      %s36 = sphi 0, %s38
      %s39 = sphi 0, %s36
      %s40 = sphi 0, %s39
      %s56 = sphi 0, %s40
      %s62 = sphi 0, %s64
      %s65 = sphi 0, %s62
      %s66 = sphi 0, %s65
      %s82 = sphi 0, %s66
      %s88 = sphi 0, %s90
      %s91 = sphi 0, %s88
      %s92 = sphi 0, %s91
      %s108 = sphi 0, %s92
    $region4: #{tpu_custom_call.1} parent=1 // loop_header_branch
      %15 = sbr.rel (%p13) target = $region8
    $region5: #{tpu_custom_call.1} parent=1 // loop_body
      %s17 = ssub.s32 %s12, 1
      %s18 = ssub.s32 %s12, 2
      %s25 = sadd.s32 1, %s20
      %p26 = scmp.ge.s32.totalorder %s25, 1
      %s27 = scalar_select %p26, 0, %s25
      %s28 = sadd.s32 1, %s19
      %s29 = scalar_select %p26, %s28, %s19
      %p30 = scmp.ge.s32.totalorder %s29, 2
      %s31 = scalar_select %p30, 0, %s29
      %s32 = sadd.s32 %s19, %s20
      %s33 = sadd.s32 %s31, %s27
      %s34 = ssub.s32 %s32, %s33
      %p35 = scmp.eq.s32.totalorder %s34, 0
      %s37 = sadd.s32 %s36, 1
      %s38 = scalar_select %p35, %s36, %s37
      %p41 = pneg %p35
      %p42 = scmp.eq.s32.totalorder %s12, 1
      %p43 = por %p41, %p42
      %p44 = scmp.ne.s32.totalorder %s36, %s39
      %p45 = scmp.eq.s32.totalorder %s12, 0
      %p46 = por %p44, %p45
      %p47 = scmp.ne.s32.totalorder %s36, %s39
      %p48 = scmp.eq.s32.totalorder %s17, 1
      %p49 = por %p47, %p48
      %p50 = scmp.ne.s32.totalorder %s39, %s40
      %p51 = scmp.eq.s32.totalorder %s17, 0
      %p52 = por %p50, %p51
      %p53 = scmp.ne.s32.totalorder %s39, %s40
      %p54 = scmp.eq.s32.totalorder %s18, 1
      %p55 = por %p53, %p54
      %p57 = scmp.ne.s32.totalorder %s40, %s56
      %p58 = scmp.eq.s32.totalorder %s18, 0
      %p59 = por %p57, %p58
      %s60 = ssub.s32 %s19, %s31
      %p61 = scmp.eq.s32.totalorder %s60, 0
      %s63 = sadd.s32 %s62, 1
      %s64 = scalar_select %p61, %s62, %s63
      %p67 = pneg %p61
      %p68 = scmp.eq.s32.totalorder %s12, 1
      %p69 = por %p67, %p68
      %p70 = scmp.ne.s32.totalorder %s62, %s65
      %p71 = scmp.eq.s32.totalorder %s12, 0
      %p72 = por %p70, %p71
      %p73 = scmp.ne.s32.totalorder %s62, %s65
      %p74 = scmp.eq.s32.totalorder %s17, 1
      %p75 = por %p73, %p74
      %p76 = scmp.ne.s32.totalorder %s65, %s66
      %p77 = scmp.eq.s32.totalorder %s17, 0
      %p78 = por %p76, %p77
      %p79 = scmp.ne.s32.totalorder %s65, %s66
      %p80 = scmp.eq.s32.totalorder %s18, 1
      %p81 = por %p79, %p80
      %p83 = scmp.ne.s32.totalorder %s66, %s82
      %p84 = scmp.eq.s32.totalorder %s18, 0
      %p85 = por %p83, %p84
      %s86 = ssub.s32 %s19, %s31
      %p87 = scmp.eq.s32.totalorder %s86, 0
      %s89 = sadd.s32 %s88, 1
      %s90 = scalar_select %p87, %s88, %s89
      %p93 = pneg %p87
      %p94 = scmp.eq.s32.totalorder %s12, 1
      %p95 = por %p93, %p94
      %p96 = scmp.ne.s32.totalorder %s88, %s91
      %p97 = scmp.eq.s32.totalorder %s12, 0
      %p98 = por %p96, %p97
      %p99 = scmp.ne.s32.totalorder %s88, %s91
      %p100 = scmp.eq.s32.totalorder %s17, 1
      %p101 = por %p99, %p100
      %p102 = scmp.ne.s32.totalorder %s91, %s92
      %p103 = scmp.eq.s32.totalorder %s17, 0
      %p104 = por %p102, %p103
      %p105 = scmp.ne.s32.totalorder %s91, %s92
      %p106 = scmp.eq.s32.totalorder %s18, 1
      %p107 = por %p105, %p106
      %p109 = scmp.ne.s32.totalorder %s92, %s108
      %p110 = scmp.eq.s32.totalorder %s18, 0
      %p111 = por %p109, %p110
      %p112 = scmp.le.s32.totalorder 1, %s12
      %p113 = scmp.lt.s32.totalorder %s12, 3
      %p114 = pnand %p112, %p113
      %p115 = pneg %p114
      // Predicated region
      $region9: #{tpu_custom_call.1} parent=5 // pred_check
        _
      $region10: #{tpu_custom_call.1} parent=5 // pred_check_branch
        %117 = sbr.rel (%p114) target = $region12
      $region11: #{tpu_custom_call.1} parent=5 // pred_region
        %s118 = ssub.s32 %s12, 1
      $region12: #{tpu_custom_call.1} parent=5 // pred_fallthru
        _
      %p119 = scmp.lt.s32.totalorder %s12, 2
      // Predicated region
      $region13: #{tpu_custom_call.1} parent=5 // pred_check
        %p120 = pneg %p119
      $region14: #{tpu_custom_call.1} parent=5 // pred_check_branch
        %122 = sbr.rel (%p120) target = $region16
      $region15: #{tpu_custom_call.1} parent=5 // pred_region
        // Predicated region
        $region17: #{tpu_custom_call.1} parent=15 // pred_check
          %p123 = pneg %p46
        $region18: #{tpu_custom_call.1} parent=15 // pred_check_branch
          %125 = sbr.rel (%p123) target = $region20
        $region19: #{tpu_custom_call.1} parent=15 // pred_region
          %s126 = sand.u32 %s36, 1
          %s127 = scalar_lea.sflag [#allocation3], %s126
          %s128 = sand.u32 %s36, 1
          %s129 = smul.addr %s128, 64
          %s130 = scalar_lea.vmem [#allocation2], %s129
          %s131 = sadd.s32 %s19, %s20
          %s132 = smul.u32 4, %s131
          %134 = vsyncadd %s127, 0
          %s135 = smul.addr %s132, 2
          %s136 = smul.addr %s135, 8
          %s137 = scalar_lea.hbm %s0, %s136
          %s138 = sshll.u32 %s137, 4
          %s139 = int_to_ptr.hbm [resolvable:$true] %s138
          %s140 = sshll.u32 %s130, 4
          %s141 = int_to_ptr.vmem [resolvable:$true] %s140
          %146 = dma.hbm_to_vmem [thread:$0]  %s139, 1024, %s141, %s127, 128, 128, 8
        $region20: #{tpu_custom_call.1} parent=15 // pred_fallthru
          _
      $region16: #{tpu_custom_call.1} parent=5 // pred_fallthru
        _
      %p147 = scmp.le.s32.totalorder 1, %s12
      %p148 = scmp.lt.s32.totalorder %s12, 3
      %p149 = pnand %p147, %p148
      %p150 = pneg %p149
      // Predicated region
      $region21: #{tpu_custom_call.1} parent=5 // pred_check
        _
      $region22: #{tpu_custom_call.1} parent=5 // pred_check_branch
        %152 = sbr.rel (%p149) target = $region24
      $region23: #{tpu_custom_call.1} parent=5 // pred_region
        %s153 = ssub.s32 %s12, 1
        %s154 = sand.u32 %s39, 1
        %s155 = scalar_lea.sflag [#allocation3], %s154
        %s156 = sand.u32 %s39, 1
        %s157 = smul.addr %s156, 64
        %s158 = scalar_lea.vmem [#allocation2], %s157
        // Predicated region
        $region25: #{tpu_custom_call.1} parent=23 // pred_check
          %p159 = pneg %p52
        $region26: #{tpu_custom_call.1} parent=23 // pred_check_branch
          %161 = sbr.rel (%p159) target = $region28
        $region27: #{tpu_custom_call.1} parent=23 // pred_region
          %163 = dma.done %s155, 1024
        $region28: #{tpu_custom_call.1} parent=23 // pred_fallthru
          _
        %s164 = sand.u32 %s39, 1
        %s165 = scalar_lea.sflag [#allocation3], %s164
        %s166 = sand.u32 %s39, 1
        %s167 = smul.addr %s166, 64
        %s168 = scalar_lea.vmem [#allocation2], %s167
        %p169 = pneg %p52
        %p170 = pneg %p49
        %p171 = pneg %p78
        %p172 = pneg %p75
        %p173 = scmp.lt.s32.totalorder %s21, 1
        %s174 = scalar_select %p173, %s21, 1
        %s175 = smul.addr %s174, 2
        %s176 = smul.addr %s175, 8
        %s177 = scalar_lea.vmem %s1, %s176
        %p178 = pneg %p104
        %p179 = pneg %p101
        %p180 = scmp.lt.s32.totalorder %s21, 1
        %s181 = scalar_select %p180, %s21, 1
        %s182 = smul.addr %s181, 2
        %s183 = smul.addr %s182, 8
        %s184 = scalar_lea.vmem %s2, %s183
        %s185 = sadd.s32 %s21, %s22
        %s186 = smul.u32 4, %s185
        %p187 = scmp.lt.s32.totalorder %s21, 1
        %s188 = scalar_select %p187, %s21, 1
        %s189 = smul.addr %s188, 2
        %s190 = smul.addr %s189, 8
        %s191 = scalar_lea.vmem %s1, %s190
        %p192 = scmp.lt.s32.totalorder %s21, 1
        %s193 = scalar_select %p192, %s21, 1
        %s194 = smul.addr %s193, 2
        %s195 = smul.addr %s194, 8
        %s196 = scalar_lea.vmem %s2, %s195
        %p197 = scmp.eq.s32.totalorder %s22, 0
        // Predicated region
        $region29: #{tpu_custom_call.1} parent=23 // pred_check
          %p198 = pneg %p197
        $region30: #{tpu_custom_call.1} parent=23 // pred_check_branch
          %200 = sbr.rel (%p198) target = $region32
        $region31: #{tpu_custom_call.1} parent=23 // pred_region
          %vm201 = vcmask 130048
          %202 = vst.msk [vmem:[%s191] sm:$0xff] %vm201, 0.0
          %vm203 = vcmask 129024
          %204 = vst.msk [vmem:[%s191 + $0x8] sm:$0x7f] %vm203, 0.0
          %vm205 = vcmask 121856
          %206 = vst.msk [vmem:[%s196] sm:$0xff] %vm205, 0.0
          %207 = vst.msk [vmem:[%s196 + $0x8] sm:$0xff] %vm205, 0.0
        $region32: #{tpu_custom_call.1} parent=23 // pred_fallthru
          _
        %v208 = vld [vmem:[%s158] sm:$0xff]
        %v209 = vld [vmem:[%s158 + $0x8] sm:$0xff]
        %v210 = vld [vmem:[%s158 + $0x10] sm:$0xff]
        %v211 = vld [vmem:[%s158 + $0x18] sm:$0xff]
        %v212 = vld [vmem:[%s158 + $0x20] sm:$0xff]
        %v213 = vld [vmem:[%s158 + $0x28] sm:$0xff]
        %v214 = vld [vmem:[%s158 + $0x30] sm:$0xff]
        %v215 = vld [vmem:[%s158 + $0x38] sm:$0xff]
        %vm224 = vcmask 1040384
        %v225 = vrot.slane %v208, 7
        %v226 = vrot.slane %v209, 7
        %v227 = vsel %vm224, %v225, %v226
        %v228 = vrot.slane %v210, 7
        %v229 = vrot.slane %v211, 7
        %v230 = vsel %vm224, %v228, %v229
        %v231 = vrot.slane %v212, 7
        %v232 = vrot.slane %v213, 7
        %v233 = vsel %vm224, %v231, %v232
        %v234 = vrot.slane %v214, 7
        %v235 = vrot.slane %v215, 7
        %v236 = vsel %vm224, %v234, %v235
        %v245 = vsub.f32 %v208, %v225
        %v246 = vsub.f32 %v209, %v227
        %v247 = vsub.f32 %v210, %v228
        %v248 = vsub.f32 %v211, %v230
        %v249 = vsub.f32 %v212, %v231
        %v250 = vsub.f32 %v213, %v233
        %v251 = vsub.f32 %v214, %v234
        %v252 = vsub.f32 %v215, %v236
        %253 = vrot.lane.b32.xlu0 %v208, 1
        %v254 = vpop.permute.xlu0 %253
        %255 = vrot.lane.b32.xlu0 %v209, 1
        %v256 = vpop.permute.xlu0 %255
        %257 = vrot.lane.b32.xlu0 %v210, 1
        %v258 = vpop.permute.xlu0 %257
        %259 = vrot.lane.b32.xlu0 %v211, 1
        %v260 = vpop.permute.xlu0 %259
        %261 = vrot.lane.b32.xlu0 %v212, 1
        %v262 = vpop.permute.xlu0 %261
        %263 = vrot.lane.b32.xlu0 %v213, 1
        %v264 = vpop.permute.xlu0 %263
        %265 = vrot.lane.b32.xlu0 %v214, 1
        %v266 = vpop.permute.xlu0 %265
        %267 = vrot.lane.b32.xlu0 %v215, 1
        %v268 = vpop.permute.xlu0 %267
        %v277 = vsub.f32 %v208, %v254
        %v278 = vsub.f32 %v209, %v256
        %v279 = vsub.f32 %v210, %v258
        %v280 = vsub.f32 %v211, %v260
        %v281 = vsub.f32 %v212, %v262
        %v282 = vsub.f32 %v213, %v264
        %v283 = vsub.f32 %v214, %v266
        %v284 = vsub.f32 %v215, %v268
        %v285 = vld [vmem:[%s191] sm:$0xff]
        %v286 = vld [vmem:[%s191 + $0x8] sm:$0x7f]
        %v287 = vmul.f32 %v245, %v245
        %v288 = vmul.f32 %v246, %v246
        %v289 = vmul.f32 %v247, %v247
        %v290 = vmul.f32 %v248, %v248
        %v291 = vmul.f32 %v249, %v249
        %v292 = vmul.f32 %v250, %v250
        %v293 = vmul.f32 %v251, %v251
        %v294 = vmul.f32 %v252, %v252
        %vm295 = vcmask 130049
        %v296 = vsel %vm295, %v287, 0.0
        %v297 = vsel %vm295, %v289, 0.0
        %v298 = vadd.f32 %v296, %v297
        %v299 = vsel %vm295, %v291, 0.0
        %v300 = vadd.f32 %v298, %v299
        %v301 = vsel %vm295, %v293, 0.0
        %v302 = vadd.f32 %v300, %v301
        %vm303 = vcmask 130048
        %v304 = vsel %vm303, %v288, 0.0
        %v305 = vsel %vm303, %v290, 0.0
        %v306 = vadd.f32 %v304, %v305
        %v307 = vsel %vm303, %v292, 0.0
        %v308 = vadd.f32 %v306, %v307
        %v309 = vsel %vm303, %v294, 0.0
        %v310 = vadd.f32 %v308, %v309
        %vm313 = vcmask 1046528
        %v314 = vrot.slane %v302, 1
        %v315 = vrot.slane %v310, 1
        %v316 = vsel %vm313, %v314, %v315
        %v319 = vadd.f32 %v285, %v316
        %v320 = vadd.f32 %v286, %v315
        %321 = vst.msk [vmem:[%s191] sm:$0xff] %vm303, %v319
        %vm322 = vcmask 129024
        %323 = vst.msk [vmem:[%s191 + $0x8] sm:$0x7f] %vm322, %v320
        %v324 = vld [vmem:[%s196] sm:$0xff]
        %v325 = vld [vmem:[%s196 + $0x8] sm:$0xff]
        %v326 = vmul.f32 %v277, %v277
        %v327 = vmul.f32 %v278, %v278
        %v328 = vmul.f32 %v279, %v279
        %v329 = vmul.f32 %v280, %v280
        %v330 = vmul.f32 %v281, %v281
        %v331 = vmul.f32 %v282, %v282
        %v332 = vmul.f32 %v283, %v283
        %v333 = vmul.f32 %v284, %v284
        %vm334 = vcmask 130056
        %v335 = vsel %vm334, %v326, 0.0
        %v336 = vsel %vm334, %v328, 0.0
        %v337 = vadd.f32 %v335, %v336
        %v338 = vsel %vm334, %v330, 0.0
        %v339 = vadd.f32 %v337, %v338
        %v340 = vsel %vm334, %v332, 0.0
        %v341 = vadd.f32 %v339, %v340
        %v342 = vsel %vm334, %v327, 0.0
        %v343 = vsel %vm334, %v329, 0.0
        %v344 = vadd.f32 %v342, %v343
        %v345 = vsel %vm334, %v331, 0.0
        %v346 = vadd.f32 %v344, %v345
        %v347 = vsel %vm334, %v333, 0.0
        %v348 = vadd.f32 %v346, %v347
        %351 = vrot.lane.b32.xlu0 %v341, 127
        %v352 = vpop.permute.xlu0 %351
        %353 = vrot.lane.b32.xlu0 %v348, 127
        %v354 = vpop.permute.xlu0 %353
        %v357 = vadd.f32 %v324, %v352
        %v358 = vadd.f32 %v325, %v354
        %vm359 = vcmask 121856
        %360 = vst.msk [vmem:[%s196] sm:$0xff] %vm359, %v357
        %361 = vst.msk [vmem:[%s196 + $0x8] sm:$0xff] %vm359, %v358
        %p362 = scmp.lt.s32.totalorder %s21, 1
        %s363 = scalar_select %p362, %s21, 1
        %s364 = smul.addr %s363, 2
        %s365 = smul.addr %s364, 8
        %s366 = scalar_lea.vmem %s1, %s365
        %p367 = scmp.lt.s32.totalorder %s21, 1
        %s368 = scalar_select %p367, %s21, 1
        %s369 = smul.addr %s368, 2
        %s370 = smul.addr %s369, 8
        %s371 = scalar_lea.vmem %s2, %s370
        // Predicated region
        $region33: #{tpu_custom_call.1} parent=23 // pred_check
          %p372 = pneg %p75
        $region34: #{tpu_custom_call.1} parent=23 // pred_check_branch
          %374 = sbr.rel (%p372) target = $region36
        $region35: #{tpu_custom_call.1} parent=23 // pred_region
          _
        $region36: #{tpu_custom_call.1} parent=23 // pred_fallthru
          _
        // Predicated region
        $region37: #{tpu_custom_call.1} parent=23 // pred_check
          %p375 = pneg %p101
        $region38: #{tpu_custom_call.1} parent=23 // pred_check_branch
          %377 = sbr.rel (%p375) target = $region40
        $region39: #{tpu_custom_call.1} parent=23 // pred_region
          _
        $region40: #{tpu_custom_call.1} parent=23 // pred_fallthru
          _
      $region24: #{tpu_custom_call.1} parent=5 // pred_fallthru
        _
      %p378 = scmp.le.s32.totalorder 2, %s12
      // Predicated region
      $region41: #{tpu_custom_call.1} parent=5 // pred_check
        %p379 = pneg %p378
      $region42: #{tpu_custom_call.1} parent=5 // pred_check_branch
        %381 = sbr.rel (%p379) target = $region44
      $region43: #{tpu_custom_call.1} parent=5 // pred_region
        %s382 = ssub.s32 %s12, 2
        // Predicated region
        $region45: #{tpu_custom_call.1} parent=43 // pred_check
          %p383 = pneg %p81
        $region46: #{tpu_custom_call.1} parent=43 // pred_check_branch
          %385 = sbr.rel (%p383) target = $region48
        $region47: #{tpu_custom_call.1} parent=43 // pred_region
          %p386 = scmp.lt.s32.totalorder %s23, 1
          %s387 = scalar_select %p386, %s23, 1
          %s388 = smul.addr %s387, 2
          %s389 = smul.addr %s388, 8
          %s390 = scalar_lea.vmem %s1, %s389
        $region48: #{tpu_custom_call.1} parent=43 // pred_fallthru
          _
        // Predicated region
        $region49: #{tpu_custom_call.1} parent=43 // pred_check
          %p391 = pneg %p107
        $region50: #{tpu_custom_call.1} parent=43 // pred_check_branch
          %393 = sbr.rel (%p391) target = $region52
        $region51: #{tpu_custom_call.1} parent=43 // pred_region
          %p394 = scmp.lt.s32.totalorder %s23, 1
          %s395 = scalar_select %p394, %s23, 1
          %s396 = smul.addr %s395, 2
          %s397 = smul.addr %s396, 8
          %s398 = scalar_lea.vmem %s2, %s397
        $region52: #{tpu_custom_call.1} parent=43 // pred_fallthru
          _
      $region44: #{tpu_custom_call.1} parent=5 // pred_fallthru
        _
    $region6: #{tpu_custom_call.1} parent=1 // loop_footer
      %s16 = sadd.s32 1, %s12
    $region7: #{tpu_custom_call.1} parent=1 // loop_footer_branch
      %11 = sbr.rel target = $region3
    $region8: #{tpu_custom_call.1} parent=1 // loop_exit
      _
    %399 = vsyncpa [#allocation3], 1
    %s400 = scalar_lea.sflag [#allocation3], 1
    %401 = vsyncpa %s400, 1

</llo_original>
